<compile_context>
chip_gen: v7x
topology: tpu7x:2x2x1
jax: 0.10.0
libtpu: 0.0.40
codegen_flags: <defaults>
</compile_context>

<pallas_src>
import jax
import jax.numpy as jnp
from jax.experimental import pallas as pl
from jax.experimental.pallas import tpu as pltpu

EPS = 1e-8
EPS2 = EPS * EPS


def _full_match_kernel(c_ref, o_ref, w2t_ref, out_ref):
    # c_ref  : (G, L, D)  cont_repres block (G batch elements per grid step)
    # o_ref  : (G, D)     other_cont_first block
    # w2t_ref: (D, M)     weight**2, pre-transposed (shared / resident across grid)
    # out_ref: (G, L, M)
    G, L, D = c_ref.shape
    M = w2t_ref.shape[1]
    GL = G * L

    c = c_ref[...].astype(jnp.float32)              # (G, L, D)
    o = o_ref[...].astype(jnp.float32)              # (G, D)
    w2t = w2t_ref[...]                              # (D, M) float32

    co = (c * o[:, None, :]).reshape(GL, D)         # rows for the numerator
    cc = (c * c).reshape(GL, D)                     # rows for ||c*w||^2
    oo = o * o                                      # (G, D) rows for ||o*w||^2

    # One stacked MXU contraction for numerator + ||c*w||^2 ...
    res = jnp.dot(jnp.concatenate([co, cc], axis=0), w2t,
                  preferred_element_type=jnp.float32)        # (2*GL, M)
    num = res[:GL, :]                               # (GL, M)
    den_c2 = res[GL:, :]                            # (GL, M)
    # ... plus a tiny one for ||o*w||^2 (replaces a per-step XLU cross-lane reduce).
    den_o2 = jnp.dot(oo, w2t, preferred_element_type=jnp.float32)  # (G, M)

    # cosine = num / (max(||c*w||, eps) * max(||o*w||, eps))
    #        = num * rsqrt(max(den_c2, eps^2)) * rsqrt(max(den_o2, eps^2))
    # NOTE: clamps each norm separately (same as the original module's behaviour
    # here); current ATen clamps the product of squared norms — only differs for
    # near-zero vectors.
    inv_c = jax.lax.rsqrt(jnp.maximum(den_c2, EPS2))          # (GL, M)
    inv_o = jax.lax.rsqrt(jnp.maximum(den_o2, EPS2))          # (G, M)

    out = (num * inv_c).reshape(G, L, M) * inv_o[:, None, :]
    out_ref[...] = out.astype(out_ref.dtype)


def full_match_lay(cont_repres, other_cont_first, weight, *, target_rows=256):
    """cont_repres [B,L,D], other_cont_first [B,D], weight [M,D] -> [B,L,M]."""
    B, L, D = cont_repres.shape
    M, Dw = weight.shape
    assert Dw == D and other_cont_first.shape == (B, D)

    # Fuse G batch elements per grid step so the stacked MXU LHS has roughly
    # `target_rows` rows (256 suits v6e/v7x 256-wide MXUs; fine on v5e too).
    # TODO(synk): on v7x re-derive G against the 64 MiB VMEM budget if
    # production L*D / L*M get large (set vmem_limit_bytes accordingly).
    G = min(B, max(1, target_rows // max(L, 1)))
    Bp = ((B + G - 1) // G) * G
    if Bp != B:
        pad = Bp - B
        # Zero padding is safe: padded rows give 0 / eps -> 0 (no NaN/Inf).
        cont_repres = jnp.pad(cont_repres, ((0, pad), (0, 0), (0, 0)))
        other_cont_first = jnp.pad(other_cont_first, ((0, pad), (0, 0)))

    # weight^2 pre-squared and pre-transposed to (D, M): computed once outside
    # the grid; the kernel contracts against it directly (no per-step transpose).
    wf = weight.astype(jnp.float32)
    w2t = jnp.transpose(wf * wf)                    # (D, M)

    out = pl.pallas_call(
        _full_match_kernel,
        out_shape=jax.ShapeDtypeStruct((Bp, L, M), jnp.float32),
        grid_spec=pltpu.PrefetchScalarGridSpec(
            num_scalar_prefetch=0,
            grid=(Bp // G,),
            in_specs=[
                pl.BlockSpec((G, L, D), lambda b: (b, 0, 0)),  # cont_repres
                pl.BlockSpec((G, D), lambda b: (b, 0)),        # other_cont_first
                pl.BlockSpec((D, M), lambda b: (0, 0)),        # weight^2 (resident)
            ],
            out_specs=pl.BlockSpec((G, L, M), lambda b: (b, 0, 0)),
        ),
        compiler_params=pltpu.CompilerParams(
            dimension_semantics=("parallel",),
        ),
    )(cont_repres, other_cont_first, w2t)

    return out[:B] if Bp != B else out


def _reference(cont_repres, other_cont_first, weight):
    # Pure-JAX reference replicating torch.nn.functional.cosine_similarity.
    c = cont_repres[:, :, None, :] * weight[None, None, :, :]               # [B,L,M,D]
    o = (other_cont_first[:, None, :] * weight[None, :, :])[:, None, :, :]  # [B,1,M,D]
    num = jnp.sum(c * o, axis=-1)
    nc = jnp.maximum(jnp.sqrt(jnp.sum(c * c, axis=-1)), EPS)
    no = jnp.maximum(jnp.sqrt(jnp.sum(o * o, axis=-1)), EPS)
    return num / (nc * no)


if __name__ == "__main__":
    # Small, module-consistent shapes: batch=2, seq(this_len)=8,
    # context_lstm_dim=32, mp_dim=16.
    B, L, D, M = 2, 8, 32, 16

    key = jax.random.PRNGKey(0)
    k1, k2, k3 = jax.random.split(key, 3)
    cont_repres = jax.random.normal(k1, (B, L, D), dtype=jnp.float32)
    other_cont_first = jax.random.normal(k2, (B, D), dtype=jnp.float32)
    # Deterministic weight init matching nn.Parameter(...).uniform_(-1, 1).
    weight = jax.random.uniform(k3, (M, D), dtype=jnp.float32, minval=-1.0, maxval=1.0)

    out = full_match_lay(cont_repres, other_cont_first, weight)
    out = jax.block_until_ready(out)

    ref = _reference(cont_repres, other_cont_first, weight)
    assert out.shape == (B, L, M)
    assert jnp.allclose(out, ref, atol=1e-5, rtol=1e-5)

    print("KERNEL_OK")
</pallas_src>

<mosaic_0001>
module attributes {stable_mosaic.version = 11 : i64} {
  func.func @_full_match_kernel(%arg0: i32, %arg1: memref<2x8x32xf32, #tpu.memory_space<vmem>>, %arg2: memref<2x32xf32, #tpu.memory_space<vmem>>, %arg3: memref<32x16xf32, #tpu.memory_space<vmem>>, %arg4: memref<2x8x16xf32, #tpu.memory_space<vmem>>) attributes {dimension_semantics = [#tpu.dimension_semantics<parallel>], iteration_bounds = array<i64: 1>, scalar_prefetch = 0 : i64, scratch_operands = 0 : i64, tpu.core_type = #tpu.core_type<tc>, window_params = [{transform_indices = @transform_0, window_bounds = array<i64: 2, 8, 32>}, {transform_indices = @transform_1, window_bounds = array<i64: 2, 32>}, {pipeline_mode = #tpu.pipeline_mode<synchronous>, transform_indices = @transform_2, window_bounds = array<i64: 32, 16>}, {transform_indices = @transform_3, window_bounds = array<i64: 2, 8, 16>}]} {
    %c0 = arith.constant 0 : index
    %c0_0 = arith.constant 0 : index
    %c0_1 = arith.constant 0 : index
    %0 = vector.load %arg1[%c0, %c0_0, %c0_1] : memref<2x8x32xf32, #tpu.memory_space<vmem>>, vector<2x8x32xf32>
    %c0_2 = arith.constant 0 : index
    %c0_3 = arith.constant 0 : index
    %1 = vector.load %arg2[%c0_2, %c0_3] : memref<2x32xf32, #tpu.memory_space<vmem>>, vector<2x32xf32>
    %c0_4 = arith.constant 0 : index
    %c0_5 = arith.constant 0 : index
    %2 = vector.load %arg3[%c0_4, %c0_5] : memref<32x16xf32, #tpu.memory_space<vmem>>, vector<32x16xf32>
    %3 = vector.shape_cast %1 : vector<2x32xf32> to vector<2x1x32xf32>
    %4 = vector.broadcast %3 : vector<2x1x32xf32> to vector<2x8x32xf32>
    %5 = arith.mulf %0, %4 : vector<2x8x32xf32>
    %6 = vector.shape_cast %5 : vector<2x8x32xf32> to vector<16x32xf32>
    %7 = arith.mulf %0, %0 : vector<2x8x32xf32>
    %8 = vector.shape_cast %7 : vector<2x8x32xf32> to vector<16x32xf32>
    %9 = arith.mulf %1, %1 : vector<2x32xf32>
    %10 = tpu.concatenate %6, %8 in 0 : vector<16x32xf32>, vector<16x32xf32> -> vector<32x32xf32>
    %cst = arith.constant dense<0.000000e+00> : vector<32x16xf32>
    %11 = tpu.matmul %10, %2, %cst {dimension_numbers = #tpu.dot_dimension_numbers<[1], [0], [0], [1], [0, 0, 1, 1], [], []>} : vector<32x32xf32>, vector<32x16xf32>, vector<32x16xf32> -> vector<32x16xf32>
    %12 = vector.extract_strided_slice %11 {offsets = [0, 0], sizes = [16, 16], strides = [1, 1]} : vector<32x16xf32> to vector<16x16xf32>
    %13 = vector.extract_strided_slice %11 {offsets = [16, 0], sizes = [16, 16], strides = [1, 1]} : vector<32x16xf32> to vector<16x16xf32>
    %cst_6 = arith.constant dense<0.000000e+00> : vector<2x16xf32>
    %14 = tpu.matmul %9, %2, %cst_6 {dimension_numbers = #tpu.dot_dimension_numbers<[1], [0], [0], [1], [0, 0, 1, 1], [], []>} : vector<2x32xf32>, vector<32x16xf32>, vector<2x16xf32> -> vector<2x16xf32>
    %cst_7 = arith.constant 1.000000e-16 : f32
    %15 = vector.broadcast %cst_7 : f32 to vector<16x16xf32>
    %16 = arith.maximumf %13, %15 : vector<16x16xf32>
    %17 = math.rsqrt %16 : vector<16x16xf32>
    %cst_8 = arith.constant 1.000000e-16 : f32
    %18 = vector.broadcast %cst_8 : f32 to vector<2x16xf32>
    %19 = arith.maximumf %14, %18 : vector<2x16xf32>
    %20 = math.rsqrt %19 : vector<2x16xf32>
    %21 = arith.mulf %12, %17 : vector<16x16xf32>
    %22 = vector.shape_cast %21 : vector<16x16xf32> to vector<2x8x16xf32>
    %23 = vector.shape_cast %20 : vector<2x16xf32> to vector<2x1x16xf32>
    %24 = vector.broadcast %23 : vector<2x1x16xf32> to vector<2x8x16xf32>
    %25 = arith.mulf %22, %24 : vector<2x8x16xf32>
    %c0_9 = arith.constant 0 : index
    %c0_10 = arith.constant 0 : index
    %c0_11 = arith.constant 0 : index
    %26 = vector.load %arg4[%c0_9, %c0_10, %c0_11] : memref<2x8x16xf32, #tpu.memory_space<vmem>>, vector<2x8x16xf32>
    tpu.vector_store %arg4[%c0_9, %c0_10, %c0_11], %25 {strides = array<i32>} : memref<2x8x16xf32, #tpu.memory_space<vmem>>, vector<2x8x16xf32>,
    return
  }
  func.func @transform_0(%arg0: i32) -> (i32, i32, i32) {
    %c0_i32 = arith.constant 0 : i32
    %c0_i32_0 = arith.constant 0 : i32
    %c0_i32_1 = arith.constant 0 : i32
    return %arg0, %c0_i32, %c0_i32_0 : i32, i32, i32
  }
  func.func @transform_1(%arg0: i32) -> (i32, i32) {
    %c0_i32 = arith.constant 0 : i32
    %c0_i32_0 = arith.constant 0 : i32
    return %arg0, %c0_i32 : i32, i32
  }
  func.func @transform_2(%arg0: i32) -> (i32, i32) {
    %c0_i32 = arith.constant 0 : i32
    %c0_i32_0 = arith.constant 0 : i32
    %c0_i32_1 = arith.constant 0 : i32
    return %c0_i32, %c0_i32_0 : i32, i32
  }
  func.func @transform_3(%arg0: i32) -> (i32, i32, i32) {
    %c0_i32 = arith.constant 0 : i32
    %c0_i32_0 = arith.constant 0 : i32
    %c0_i32_1 = arith.constant 0 : i32
    return %arg0, %c0_i32, %c0_i32_0 : i32, i32, i32
  }
}

</mosaic_0001>

<llo_original>
// kernel: tpu_custom_call.1
$region0: #{tpu_custom_call.1}
  #allocation0 [shape = 'u32[]', space=smem, size = 0x4, offset = 0x4, fixed_abs, tag = 'smem constant byte address 0x4 - core index']
  #allocation1 [shape = 'u32[144,128]{1,0:T(1,128)}', space=vmem, size = 0x12000, scoped, tag = 'internal scratch']
  %s0 = inlined_call_operand.vmem [shape: f32[2,8,32], index: 0, kind: input, shape index: {}]
  %s1 = inlined_call_operand.vmem [shape: f32[2,32], index: 1, kind: input, shape index: {}]
  %s2 = inlined_call_operand.vmem [shape: f32[32,16], index: 2, kind: input, shape index: {}]
  %s3 = inlined_call_operand.hbm [shape: f32[2,8,16], index: 3, kind: output, shape index: {}]
  %s4 = sld [smem:[#allocation0]]
  $region22: #{tpu_custom_call.1} parent=0
    _
  %s6 = ssub.s32 1, %s4
  %s7 = scalar_select 0, %s6, %s4
  $region1: #{tpu_custom_call.1} parent=0
    #allocation2 [shape = 'u8[8192]{0}', space=vmem, size = 0x2000, scoped, tag = 'output window, operand 0, single buffered']
    #allocation3 [shape = 's32[1]{0}', space=sflag, size = 0x4, scoped, tag = 'scoped memory for tpu_custom_call.1']
    %8 = vsyncpa [#allocation3], 0
    // Predicated region
    $region2: #{tpu_custom_call.1} parent=1 // pred_check
      _
    $region3: #{tpu_custom_call.1} parent=1 // pred_check_branch
      %10 = sbr.rel (0) target = $region5
    $region4: #{tpu_custom_call.1} parent=1 // pred_region
      _
    $region5: #{tpu_custom_call.1} parent=1 // pred_fallthru
      _
    // Predicated region
    $region6: #{tpu_custom_call.1} parent=1 // pred_check
      _
    $region7: #{tpu_custom_call.1} parent=1 // pred_check_branch
      %12 = sbr.rel (0) target = $region9
    $region8: #{tpu_custom_call.1} parent=1 // pred_region
      _
    $region9: #{tpu_custom_call.1} parent=1 // pred_fallthru
      _
    // Predicated region
    $region10: #{tpu_custom_call.1} parent=1 // pred_check
      _
    $region11: #{tpu_custom_call.1} parent=1 // pred_check_branch
      %14 = sbr.rel (0) target = $region13
    $region12: #{tpu_custom_call.1} parent=1 // pred_region
      _
    $region13: #{tpu_custom_call.1} parent=1 // pred_fallthru
      _
    %v15 = vld [vmem:[%s0] sm:$0xff]
    %v16 = vld [vmem:[%s0 + $0x8] sm:$0xff]
    %v17 = vld [vmem:[%s1] sm:$0x3]
    %v18 = vld [vmem:[%s2] sm:$0xff]
    %v19 = vld [vmem:[%s2 + $0x8] sm:$0xff]
    %v20 = vld [vmem:[%s2 + $0x10] sm:$0xff]
    %v21 = vld [vmem:[%s2 + $0x18] sm:$0xff]
    %v24 = vunpack.c.l.s4 1966171168
    %v25 = vunpack.c.0.s8 %v24
    %v26 = vlaneseq
    %v27 = vshrl.u32 %v26, 7
    %v28 = vsub.s32 %v25, %v27
    %v29 = vrot.slane %v17, %v28
    %v30 = vcombine.high %v29, %v29
    %v32 = vunpack.c.l.s4 1966171168
    %v33 = vunpack.c.0.s8 %v32
    %v34 = vlaneseq
    %v35 = vshrl.u32 %v34, 7
    %v36 = vsub.s32 %v33, %v35
    %v37 = vrot.slane %v29, %v36
    %v39 = vunpack.c.l.s4 1966171168
    %v40 = vunpack.c.0.s8 %v39
    %v41 = vlaneseq
    %v42 = vshrl.u32 %v41, 7
    %v43 = vsub.s32 %v40, %v42
    %v44 = vrot.slane %v30, %v43
    %v45 = vlaneseq
    %v46 = vshrl.u32 %v45, 7
    %v47 = vsub.s32 0, %v46
    %v48 = vrot.slane %v37, %v47
    %v49 = vlaneseq
    %v50 = vshrl.u32 %v49, 7
    %v51 = vsub.s32 0, %v50
    %v52 = vrot.slane %v44, %v51
    %v55 = vmul.f32 %v15, %v48
    %v56 = vmul.f32 %v16, %v52
    %v57 = vmul.f32 %v15, %v15
    %v58 = vmul.f32 %v16, %v16
    %v59 = vmul.f32 %v17, %v17
    %vm60 = vcmask 261120
    %v62 = vsel %vm60, %v55, 0
    %v65 = vsel %vm60, %v56, 0
    %v68 = vsel %vm60, %v57, 0
    %v71 = vsel %vm60, %v58, 0
    %73 = vmatprep.subr.mxu0 0.0
    %74 = vmatpush1.msra.mxu0 %v18
    %75 = vmatprep.subr.mxu0 0.0
    %76 = vmatpush1.msra.mxu0 %v19
    %77 = vmatprep.subr.mxu0 0.0
    %78 = vmatpush1.msra.mxu0 %v20
    %79 = vmatprep.subr.mxu0 0.0
    %80 = vmatpush1.msra.mxu0 %v21
    %81 = vmatprep.subr.mxu0 0.0
    %82 = vmatpush1.msra.mxu0 0.0
    %83 = vmatprep.subr.mxu0 0.0
    %84 = vmatpush1.msra.mxu0 0.0
    %85 = vmatprep.subr.mxu0 0.0
    %86 = vmatpush1.msra.mxu0 0.0
    %87 = vmatprep.subr.mxu0 0.0
    %88 = vmatpush1.msra.mxu0 0.0
    %89 = vmatprep.subr.mxu0 0.0
    %90 = vmatpush1.msra.mxu0 0.0
    %91 = vmatprep.subr.mxu0 0.0
    %92 = vmatpush1.msra.mxu0 0.0
    %93 = vmatprep.subr.mxu0 0.0
    %94 = vmatpush1.msra.mxu0 0.0
    %95 = vmatprep.subr.mxu0 0.0
    %96 = vmatpush1.msra.mxu0 0.0
    %97 = vmatprep.subr.mxu0 0.0
    %98 = vmatpush1.msra.mxu0 0.0
    %99 = vmatprep.subr.mxu0 0.0
    %100 = vmatpush1.msra.mxu0 0.0
    %101 = vmatprep.subr.mxu0 0.0
    %102 = vmatpush1.msra.mxu0 0.0
    %103 = vmatprep.subr.mxu0 0.0
    %104 = vmatpush1.msra.mxu0 0.0
    %105 = vmatprep.subr.mxu0 0.0
    %106 = vmatpush1.msra.mxu0 0.0
    %107 = vmatprep.subr.mxu0 0.0
    %108 = vmatpush1.msra.mxu0 0.0
    %109 = vmatprep.subr.mxu0 0.0
    %110 = vmatpush1.msra.mxu0 0.0
    %111 = vmatprep.subr.mxu0 0.0
    %112 = vmatpush1.msra.mxu0 0.0
    %113 = vmatprep.subr.mxu0 0.0
    %114 = vmatpush1.msra.mxu0 0.0
    %115 = vmatprep.subr.mxu0 0.0
    %116 = vmatpush1.msra.mxu0 0.0
    %117 = vmatprep.subr.mxu0 0.0
    %118 = vmatpush1.msra.mxu0 0.0
    %119 = vmatprep.subr.mxu0 0.0
    %120 = vmatpush1.msra.mxu0 0.0
    %121 = vmatprep.subr.mxu0 0.0
    %122 = vmatpush1.msra.mxu0 0.0
    %123 = vmatprep.subr.mxu0 0.0
    %124 = vmatpush1.msra.mxu0 0.0
    %125 = vmatprep.subr.mxu0 0.0
    %126 = vmatpush1.msra.mxu0 0.0
    %127 = vmatprep.subr.mxu0 0.0
    %128 = vmatpush1.msra.mxu0 0.0
    %129 = vmatprep.subr.mxu0 0.0
    %130 = vmatpush1.msra.mxu0 0.0
    %131 = vmatprep.subr.mxu0 0.0
    %132 = vmatpush1.msra.mxu0 0.0
    %133 = vmatprep.subr.mxu0 0.0
    %134 = vmatpush1.msra.mxu0 0.0
    %135 = vmatprep.subr.mxu0 0.0
    %136 = vmatpush1.msra.mxu0 0.0
    %137 = vmatprep.mubr.f32.mxu0 0.0
    %138 = vmatmul.mubr.f32.gmra.mrb[0].mxu0 %v62
    %v139 = vpop.f32.mrb[0].mxu0
    %v140 = vadd.f32 0.0, %v139
    %v141 = vpop.f32.mrb[0].mxu0
    %142 = vmatprep.mubr.f32.mxu0 0.0
    %143 = vmatmul.mubr.f32.gmra.mrb[0].mxu0 %v65
    %v144 = vpop.f32.mrb[0].mxu0
    %v145 = vadd.f32 0.0, %v144
    %v146 = vpop.f32.mrb[0].mxu0
    %147 = vmatprep.mubr.f32.mxu0 0.0
    %148 = vmatmul.mubr.f32.gmra.mrb[0].mxu0 %v68
    %v149 = vpop.f32.mrb[0].mxu0
    %v150 = vadd.f32 0.0, %v149
    %v151 = vpop.f32.mrb[0].mxu0
    %152 = vmatprep.mubr.f32.mxu0 0.0
    %153 = vmatmul.mubr.f32.gmra.mrb[0].mxu0 %v71
    %v154 = vpop.f32.mrb[0].mxu0
    %v155 = vadd.f32 0.0, %v154
    %v156 = vpop.f32.mrb[0].mxu0
    %157 = vdwg.mxu0
    %v159 = vsel %vm60, %v59, 0
    %161 = vmatprep.subr.mxu0 0.0
    %162 = vmatpush1.msra.mxu0 %v18
    %163 = vmatprep.subr.mxu0 0.0
    %164 = vmatpush1.msra.mxu0 %v19
    %165 = vmatprep.subr.mxu0 0.0
    %166 = vmatpush1.msra.mxu0 %v20
    %167 = vmatprep.subr.mxu0 0.0
    %168 = vmatpush1.msra.mxu0 %v21
    %169 = vmatprep.subr.mxu0 0.0
    %170 = vmatpush1.msra.mxu0 0.0
    %171 = vmatprep.subr.mxu0 0.0
    %172 = vmatpush1.msra.mxu0 0.0
    %173 = vmatprep.subr.mxu0 0.0
    %174 = vmatpush1.msra.mxu0 0.0
    %175 = vmatprep.subr.mxu0 0.0
    %176 = vmatpush1.msra.mxu0 0.0
    %177 = vmatprep.subr.mxu0 0.0
    %178 = vmatpush1.msra.mxu0 0.0
    %179 = vmatprep.subr.mxu0 0.0
    %180 = vmatpush1.msra.mxu0 0.0
    %181 = vmatprep.subr.mxu0 0.0
    %182 = vmatpush1.msra.mxu0 0.0
    %183 = vmatprep.subr.mxu0 0.0
    %184 = vmatpush1.msra.mxu0 0.0
    %185 = vmatprep.subr.mxu0 0.0
    %186 = vmatpush1.msra.mxu0 0.0
    %187 = vmatprep.subr.mxu0 0.0
    %188 = vmatpush1.msra.mxu0 0.0
    %189 = vmatprep.subr.mxu0 0.0
    %190 = vmatpush1.msra.mxu0 0.0
    %191 = vmatprep.subr.mxu0 0.0
    %192 = vmatpush1.msra.mxu0 0.0
    %193 = vmatprep.subr.mxu0 0.0
    %194 = vmatpush1.msra.mxu0 0.0
    %195 = vmatprep.subr.mxu0 0.0
    %196 = vmatpush1.msra.mxu0 0.0
    %197 = vmatprep.subr.mxu0 0.0
    %198 = vmatpush1.msra.mxu0 0.0
    %199 = vmatprep.subr.mxu0 0.0
    %200 = vmatpush1.msra.mxu0 0.0
    %201 = vmatprep.subr.mxu0 0.0
    %202 = vmatpush1.msra.mxu0 0.0
    %203 = vmatprep.subr.mxu0 0.0
    %204 = vmatpush1.msra.mxu0 0.0
    %205 = vmatprep.subr.mxu0 0.0
    %206 = vmatpush1.msra.mxu0 0.0
    %207 = vmatprep.subr.mxu0 0.0
    %208 = vmatpush1.msra.mxu0 0.0
    %209 = vmatprep.subr.mxu0 0.0
    %210 = vmatpush1.msra.mxu0 0.0
    %211 = vmatprep.subr.mxu0 0.0
    %212 = vmatpush1.msra.mxu0 0.0
    %213 = vmatprep.subr.mxu0 0.0
    %214 = vmatpush1.msra.mxu0 0.0
    %215 = vmatprep.subr.mxu0 0.0
    %216 = vmatpush1.msra.mxu0 0.0
    %217 = vmatprep.subr.mxu0 0.0
    %218 = vmatpush1.msra.mxu0 0.0
    %219 = vmatprep.subr.mxu0 0.0
    %220 = vmatpush1.msra.mxu0 0.0
    %221 = vmatprep.subr.mxu0 0.0
    %222 = vmatpush1.msra.mxu0 0.0
    %223 = vmatprep.subr.mxu0 0.0
    %224 = vmatpush1.msra.mxu0 0.0
    %225 = vmatprep.mubr.f32.mxu0 0.0
    %226 = vmatmul.mubr.f32.gmra.mrb[0].mxu0 %v159
    %v227 = vpop.f32.mrb[0].mxu0
    %v228 = vadd.f32 0.0, %v227
    %v229 = vpop.f32.mrb[0].mxu0
    %230 = vdwg.mxu0
    %v231 = vmax.f32 %v150, 1e-16
    %v232 = vmax.f32 %v155, 1e-16
    %v233 = vrsqrt.pop %v231
    %v234 = vrsqrt.pop %v232
    %v235 = vmax.f32 %v228, 1e-16
    %v236 = vrsqrt.pop %v235
    %v237 = vmul.f32 %v140, %v233
    %v238 = vmul.f32 %v145, %v234
    %v241 = vunpack.c.l.s4 1966171168
    %v242 = vunpack.c.0.s8 %v241
    %v243 = vlaneseq
    %v244 = vshrl.u32 %v243, 7
    %v245 = vsub.s32 %v242, %v244
    %v246 = vrot.slane %v236, %v245
    %v247 = vcombine.high %v246, %v246
    %v249 = vunpack.c.l.s4 1966171168
    %v250 = vunpack.c.0.s8 %v249
    %v251 = vlaneseq
    %v252 = vshrl.u32 %v251, 7
    %v253 = vsub.s32 %v250, %v252
    %v254 = vrot.slane %v246, %v253
    %v256 = vunpack.c.l.s4 1966171168
    %v257 = vunpack.c.0.s8 %v256
    %v258 = vlaneseq
    %v259 = vshrl.u32 %v258, 7
    %v260 = vsub.s32 %v257, %v259
    %v261 = vrot.slane %v247, %v260
    %v262 = vlaneseq
    %v263 = vshrl.u32 %v262, 7
    %v264 = vsub.s32 0, %v263
    %v265 = vrot.slane %v254, %v264
    %v266 = vlaneseq
    %v267 = vshrl.u32 %v266, 7
    %v268 = vsub.s32 0, %v267
    %v269 = vrot.slane %v261, %v268
    %v272 = vmul.f32 %v237, %v265
    %v273 = vmul.f32 %v238, %v269
    %vm274 = vcmask 130048
    %275 = vst.msk [vmem:[#allocation2] sm:$0xff] %vm274, %v272
    %276 = vst.msk [vmem:[#allocation2 + $0x8] sm:$0xff] %vm274, %v273
    // Predicated region
    $region14: #{tpu_custom_call.1} parent=1 // pred_check
      _
    $region15: #{tpu_custom_call.1} parent=1 // pred_check_branch
      %278 = sbr.rel (0) target = $region17
    $region16: #{tpu_custom_call.1} parent=1 // pred_region
      %s280 = ssub.s32 256, 256
      %281 = vsyncadd [#allocation3], %s280
      %s282 = sshll.u32 [#allocation2], 4
      %s283 = int_to_ptr.vmem [resolvable:$true] %s282
      %288 = dma.vmem_to_hbm [thread:$0]  %s283, 256, %s3, [#allocation3], 128, 128, 8
    $region17: #{tpu_custom_call.1} parent=1 // pred_fallthru
      _
    // Predicated region
    $region18: #{tpu_custom_call.1} parent=1 // pred_check
      _
    $region19: #{tpu_custom_call.1} parent=1 // pred_check_branch
      %290 = sbr.rel (0) target = $region21
    $region20: #{tpu_custom_call.1} parent=1 // pred_region
      %291 = dma.done [#allocation3], 256
    $region21: #{tpu_custom_call.1} parent=1 // pred_fallthru
      _
    %292 = vsyncpa [#allocation3], 1

</llo_original>
